<compile_context>
chip_gen: v7x
topology: tpu7x:2x2x1
jax: 0.10.0
libtpu: 0.0.40
codegen_flags: <defaults>
</compile_context>

<pallas_src>
import math

import jax
import jax.numpy as jnp
from jax.experimental import pallas as pl
from jax.experimental.pallas import tpu as pltpu


# ---------------------------------------------------------------------------
# Positional-encoding buffer (matches PyTorch PositionalEncoding.__init__).
# ---------------------------------------------------------------------------
def _build_pe(d_model: int, max_len: int) -> jnp.ndarray:
    position = jnp.arange(max_len, dtype=jnp.float32)[:, None]            # (L, 1)
    div_term = jnp.exp(
        jnp.arange(0, d_model, 2, dtype=jnp.float32) * (-math.log(10000.0) / d_model)
    )                                                                      # (D/2,)
    ang = position * div_term                                              # (L, D/2)
    # pe[:, 0::2] = sin, pe[:, 1::2] = cos (interleaved along the last axis).
    pe = jnp.stack([jnp.sin(ang), jnp.cos(ang)], axis=-1).reshape(max_len, d_model)
    return pe.astype(jnp.float32)                                          # (L, D)


# ---------------------------------------------------------------------------
# Kernel: lane-dense broadcast add on the flattened (B, S*D) view.
# ---------------------------------------------------------------------------
def _add_pe_kernel(x_ref, pe_ref, o_ref):
    # x_ref/o_ref: (tB, cF) tile of the flattened input/output.
    # pe_ref:      (1, cF) tile of the flattened positional encoding; its
    #              index_map ignores the inner (batch) grid axis, so its DMA is
    #              skipped after the first batch tile of each lane chunk.
    o_ref[...] = x_ref[...] + pe_ref[...]          # VPU broadcast add


# ---------------------------------------------------------------------------
# Per-generation tiling budgets.
# ---------------------------------------------------------------------------
_GEN_SETTINGS = {
    # generation: (target_block_bytes, vmem_limit_cap_bytes)
    "v5e":     (2 * 1024 * 1024, 32 << 20),
    "v6e":     (4 * 1024 * 1024, 64 << 20),
    "v7x":     (6 * 1024 * 1024, 48 << 20),   # v7x has 64 MiB VMEM; stay well under
    "default": (2 * 1024 * 1024, 32 << 20),
}


def _tpu_generation() -> str:
    try:
        kind = jax.devices()[0].device_kind.lower()
    except Exception:
        return "default"
    if "v5 lite" in kind or "v5e" in kind or "v5lite" in kind:
        return "v5e"
    if "v6" in kind:
        return "v6e"
    if "v7" in kind or "7x" in kind:
        return "v7x"
    return "default"


def _sublane_multiple(itemsize: int) -> int:
    # 32-bit rows tile sublanes in 8s; 16-bit pack 2 rows/sublane (16);
    # 8-bit pack 4 rows/sublane (32).
    return {4: 8, 2: 16, 1: 32}.get(itemsize, 8)


def _choose_tiles(B: int, F: int, itemsize: int, target_block_bytes: int,
                  *, want_two_steps: bool = False):
    """Pick (batch_tile tB, lane_tile cF).

    cF is the largest multiple of 128 under the byte budget (or the full axis
    when F <= 128); it does NOT need to divide F — the grid uses pl.cdiv and
    Pallas handles the ragged last block.  tB is a dtype-aware sublane
    multiple (or the full batch), clamped to the byte budget.
    """
    sub = _sublane_multiple(itemsize)

    # ---- lane tile ----
    if F <= 128:
        cF = F                                    # full-dim block (legal, tiny)
    else:
        nominal_rows = min(B, sub)
        max_groups = max(1, target_block_bytes // (nominal_rows * itemsize * 128))
        cF = min(F // 128, max_groups) * 128
    n_chunks = pl.cdiv(F, cF)

    # ---- batch-row tile ----
    rows_budget = max(1, target_block_bytes // (cF * itemsize))
    if B <= rows_budget:
        tB = B                                    # full batch dim (legal), in budget
    else:
        tB = max(sub, (rows_budget // sub) * sub) # multiple of sublane packing
        tB = min(tB, B)
    n_btiles = pl.cdiv(B, tB)

    # ---- v7x: make sure both TensorCores get work on non-trivial problems ----
    if (want_two_steps and n_chunks == 1 and n_btiles == 1
            and B * F * itemsize > (1 << 20)):
        if F >= 256:
            groups = pl.cdiv(F, 128)
            cF = ((groups + 1) // 2) * 128        # ~half the lane axis, 128-aligned
            n_chunks = pl.cdiv(F, cF)
        elif B >= 2 * sub:
            tB = max(sub, ((B // 2) // sub) * sub)
            n_btiles = pl.cdiv(B, tB)

    return tB, cF, n_chunks, n_btiles


# ---------------------------------------------------------------------------
# Forward wrapper.
# ---------------------------------------------------------------------------
def positional_encoding_forward(x: jnp.ndarray, pe_flat: jnp.ndarray,
                                *, in_place: bool = False) -> jnp.ndarray:
    """x: (B, S, D); pe_flat: (1, max_len*D), already cast to x.dtype ideally."""
    B, S, D = x.shape
    max_len = pe_flat.shape[1] // D
    if S > max_len:
        raise ValueError(f"sequence length {S} exceeds max_len {max_len}")
    if pe_flat.shape != (1, max_len * D):
        raise ValueError(f"pe_flat must have shape (1, max_len*D), got {pe_flat.shape}")
    if pe_flat.dtype != x.dtype:                  # fallback; normally pre-cast once
        pe_flat = pe_flat.astype(x.dtype)

    F = S * D
    itemsize = jnp.dtype(x.dtype).itemsize
    x2 = x.reshape(B, F)                          # layout plumbing stays in XLA

    gen = _tpu_generation()
    target_block_bytes, vmem_cap = _GEN_SETTINGS.get(gen, _GEN_SETTINGS["default"])

    tB, cF, n_chunks, n_btiles = _choose_tiles(
        B, F, itemsize, target_block_bytes, want_two_steps=(gen == "v7x"))

    # pe operand: when the lane tile is 128-aligned we feed the full flattened
    # buffer (no per-call slice); the grid only ever touches the first S*D
    # columns' worth of chunks and partial output blocks are masked, so any
    # pe data past column F in the last chunk never reaches the output.
    # Otherwise (F <= 128) slice so the block equals the full dims (legal).
    pe_in = pe_flat if cF % 128 == 0 else pe_flat[:, :F]

    grid = (n_chunks, n_btiles)                   # batch innermost -> pe DMA dedup

    # Explicit VMEM budget: x-tile + out-tile + pe-tile, each double-buffered,
    # plus headroom; clamped to a safe per-generation cap.
    block_bytes = tB * cF * itemsize
    pe_bytes = cF * itemsize
    vmem_limit = int(min(vmem_cap,
                         max(2 * (2 * block_bytes + pe_bytes) + (4 << 20),
                             16 << 20)))

    out_flat = pl.pallas_call(
        _add_pe_kernel,
        out_shape=jax.ShapeDtypeStruct((B, F), x.dtype),
        grid_spec=pltpu.PrefetchScalarGridSpec(
            num_scalar_prefetch=0,
            grid=grid,
            in_specs=[
                pl.BlockSpec((tB, cF), lambda c, b: (b, c)),   # x tile
                pl.BlockSpec((1, cF), lambda c, b: (0, c)),    # pe tile (b-invariant)
            ],
            out_specs=pl.BlockSpec((tB, cF), lambda c, b: (b, c)),
        ),
        compiler_params=pltpu.CompilerParams(
            dimension_semantics=("parallel", "parallel"),
            vmem_limit_bytes=vmem_limit,
        ),
        # Only a real win when x is donated at a jit boundary; harmless otherwise.
        input_output_aliases=({0: 0} if in_place else {}),
    )(x2, pe_in)

    return out_flat.reshape(B, S, D)


class PositionalEncoding:
    """JAX/Pallas port of the PyTorch module; pe is built once at init and the
    flattened, dtype-cast buffer is cached per dtype (no per-call pe prep)."""

    def __init__(self, d_model: int, max_len: int = 5000):
        self.d_model = d_model
        self.max_len = max_len
        self.pe = _build_pe(d_model, max_len)                   # (L, D) float32
        self._pe_flat_cache = {}

    def _pe_flat(self, dtype):
        dt = jnp.dtype(dtype)
        if dt not in self._pe_flat_cache:
            self._pe_flat_cache[dt] = (
                self.pe.astype(dt).reshape(1, self.max_len * self.d_model))
        return self._pe_flat_cache[dt]

    def __call__(self, x: jnp.ndarray, *, in_place: bool = False) -> jnp.ndarray:
        return positional_encoding_forward(x, self._pe_flat(x.dtype),
                                           in_place=in_place)


if __name__ == "__main__":
    d_model = 48
    max_len = 96
    B, S = 2, 16

    encod_block = PositionalEncoding(d_model=d_model, max_len=max_len)

    key = jax.random.PRNGKey(0)
    x = jax.random.normal(key, (B, S, d_model), dtype=jnp.float32)

    out = jax.block_until_ready(encod_block(x))

    # Pure-JAX reference (same math as the PyTorch forward).
    ref = x + encod_block.pe[None, :S, :]
    assert out.shape == (B, S, d_model)
    assert jnp.allclose(out, ref, atol=1e-6, rtol=1e-6)

    # bf16 path (dtype-aware sublane tiling, cached bf16 pe buffer).
    x_bf16 = x.astype(jnp.bfloat16)
    out_bf16 = jax.block_until_ready(encod_block(x_bf16))
    ref_bf16 = x_bf16 + encod_block.pe[None, :S, :].astype(jnp.bfloat16)
    assert out_bf16.dtype == jnp.bfloat16
    assert jnp.allclose(out_bf16.astype(jnp.float32),
                        ref_bf16.astype(jnp.float32), atol=1e-2, rtol=1e-2)

    print("KERNEL_OK")
</pallas_src>

<mosaic_0001>
module attributes {stable_mosaic.version = 11 : i64} {
  func.func @_add_pe_kernel(%arg0: i32, %arg1: i32, %arg2: memref<2x768xf32, #tpu.memory_space<vmem>>, %arg3: memref<1x768xf32, #tpu.memory_space<vmem>>, %arg4: memref<2x768xf32, #tpu.memory_space<vmem>>) attributes {dimension_semantics = [#tpu.dimension_semantics<parallel>, #tpu.dimension_semantics<parallel>], iteration_bounds = array<i64: 1, 1>, scalar_prefetch = 0 : i64, scratch_operands = 0 : i64, tpu.core_type = #tpu.core_type<tc>, window_params = [{transform_indices = @transform_0, window_bounds = array<i64: 2, 768>}, {transform_indices = @transform_1, window_bounds = array<i64: 1, 768>}, {transform_indices = @transform_2, window_bounds = array<i64: 2, 768>}]} {
    %c0 = arith.constant 0 : index
    %c0_0 = arith.constant 0 : index
    %0 = vector.load %arg2[%c0, %c0_0] : memref<2x768xf32, #tpu.memory_space<vmem>>, vector<2x768xf32>
    %c0_1 = arith.constant 0 : index
    %c0_2 = arith.constant 0 : index
    %1 = vector.load %arg3[%c0_1, %c0_2] : memref<1x768xf32, #tpu.memory_space<vmem>>, vector<1x768xf32>
    %2 = vector.broadcast %1 : vector<1x768xf32> to vector<2x768xf32>
    %3 = arith.addf %0, %2 : vector<2x768xf32>
    %c0_3 = arith.constant 0 : index
    %c0_4 = arith.constant 0 : index
    %4 = vector.load %arg4[%c0_3, %c0_4] : memref<2x768xf32, #tpu.memory_space<vmem>>, vector<2x768xf32>
    tpu.vector_store %arg4[%c0_3, %c0_4], %3 {strides = array<i32>} : memref<2x768xf32, #tpu.memory_space<vmem>>, vector<2x768xf32>,
    return
  }
  func.func @transform_0(%arg0: i32, %arg1: i32) -> (i32, i32) {
    %c0_i32 = arith.constant 0 : i32
    return %arg1, %arg0 : i32, i32
  }
  func.func @transform_1(%arg0: i32, %arg1: i32) -> (i32, i32) {
    %c0_i32 = arith.constant 0 : i32
    %c0_i32_0 = arith.constant 0 : i32
    return %c0_i32, %arg0 : i32, i32
  }
  func.func @transform_2(%arg0: i32, %arg1: i32) -> (i32, i32) {
    %c0_i32 = arith.constant 0 : i32
    return %arg1, %arg0 : i32, i32
  }
}

</mosaic_0001>

<llo_original>
// kernel: tpu_custom_call.1
$region0: #{tpu_custom_call.1}
  #allocation0 [shape = 'u32[]', space=smem, size = 0x4, offset = 0x4, fixed_abs, tag = 'smem constant byte address 0x4 - core index']
  #allocation1 [shape = 'u32[144,128]{1,0:T(1,128)}', space=vmem, size = 0x12000, scoped, tag = 'internal scratch']
  %s0 = inlined_call_operand.hbm [shape: f32[2,768], index: 0, kind: input, shape index: {}]
  %s1 = inlined_call_operand.hbm [shape: f32[1,4608], index: 1, kind: input, shape index: {}]
  %s2 = inlined_call_operand.hbm [shape: f32[2,768], index: 2, kind: output, shape index: {}]
  %s3 = sld [smem:[#allocation0]]
  $region26: #{tpu_custom_call.1} parent=0
    _
  %s5 = ssub.s32 1, %s3
  %s6 = scalar_select 0, %s5, %s3
  $region1: #{tpu_custom_call.1} parent=0
    #allocation2 [shape = 'u8[6144]{0}', space=vmem, size = 0x1800, scoped, tag = 'input window, operand 0, single buffered']
    #allocation3 [shape = 's32[1]{0}', space=sflag, size = 0x4, scoped, tag = 'scoped memory for tpu_custom_call.1']
    #allocation4 [shape = 's32[1]{0}', space=sflag, size = 0x4, scoped, tag = 'scoped memory for tpu_custom_call.1']
    #allocation5 [shape = 'u8[3072]{0}', space=vmem, size = 0xc00, scoped, tag = 'input window, operand 1, single buffered']
    #allocation6 [shape = 's32[1]{0}', space=sflag, size = 0x4, scoped, tag = 'scoped memory for tpu_custom_call.1']
    #allocation7 [shape = 'u8[6144]{0}', space=vmem, size = 0x1800, scoped, tag = 'output window, operand 0, single buffered']
    %7 = vsyncpa [#allocation3], 0
    %8 = vsyncpa [#allocation6], 0
    %9 = vsyncpa [#allocation4], 0
    // Predicated region
    $region2: #{tpu_custom_call.1} parent=1 // pred_check
      _
    $region3: #{tpu_custom_call.1} parent=1 // pred_check_branch
      %11 = sbr.rel (0) target = $region5
    $region4: #{tpu_custom_call.1} parent=1 // pred_region
      %s13 = ssub.s32 192, 192
      %14 = vsyncadd [#allocation3], %s13
      %s16 = sshll.u32 [#allocation2], 4
      %s17 = int_to_ptr.vmem [resolvable:$true] %s16
      %19 = dma.hbm_to_vmem [thread:$0]  %s0, 192, %s17, [#allocation3]
    $region5: #{tpu_custom_call.1} parent=1 // pred_fallthru
      _
    // Predicated region
    $region6: #{tpu_custom_call.1} parent=1 // pred_check
      _
    $region7: #{tpu_custom_call.1} parent=1 // pred_check_branch
      %21 = sbr.rel (0) target = $region9
    $region8: #{tpu_custom_call.1} parent=1 // pred_region
      %s23 = ssub.s32 96, 96
      %24 = vsyncadd [#allocation6], %s23
      %s26 = sshll.u32 [#allocation5], 4
      %s27 = int_to_ptr.vmem [resolvable:$true] %s26
      %29 = dma.hbm_to_vmem [thread:$0]  %s1, 96, %s27, [#allocation6]
    $region9: #{tpu_custom_call.1} parent=1 // pred_fallthru
      _
    // Predicated region
    $region10: #{tpu_custom_call.1} parent=1 // pred_check
      _
    $region11: #{tpu_custom_call.1} parent=1 // pred_check_branch
      %31 = sbr.rel (0) target = $region13
    $region12: #{tpu_custom_call.1} parent=1 // pred_region
      %32 = dma.done [#allocation3], 192
    $region13: #{tpu_custom_call.1} parent=1 // pred_fallthru
      _
    // Predicated region
    $region14: #{tpu_custom_call.1} parent=1 // pred_check
      _
    $region15: #{tpu_custom_call.1} parent=1 // pred_check_branch
      %34 = sbr.rel (0) target = $region17
    $region16: #{tpu_custom_call.1} parent=1 // pred_region
      %35 = dma.done [#allocation6], 96
    $region17: #{tpu_custom_call.1} parent=1 // pred_fallthru
      _
    %v36 = vld [vmem:[#allocation2] sm:$0xff]
    %v37 = vld [vmem:[#allocation2 + $0x8] sm:$0xf]
    %v38 = vld [vmem:[#allocation5] sm:$0x3f]
    %v40 = vlaneseq
    %v41 = vshrl.u32 %v40, 7
    %v42 = vsub.s32 0, %v41
    %v43 = vrot.slane %v38, %v42
    %v44 = vlaneseq
    %v45 = vshrl.u32 %v44, 7
    %v46 = vsub.s32 1, %v45
    %v47 = vrot.slane %v38, %v46
    %v48 = vlaneseq
    %v49 = vshrl.u32 %v48, 7
    %v50 = vsub.s32 2, %v49
    %v51 = vrot.slane %v38, %v50
    %v52 = vlaneseq
    %v53 = vshrl.u32 %v52, 7
    %v54 = vsub.s32 3, %v53
    %v55 = vrot.slane %v38, %v54
    %v56 = vlaneseq
    %v57 = vshrl.u32 %v56, 7
    %v58 = vsub.s32 4, %v57
    %v59 = vrot.slane %v38, %v58
    %v60 = vlaneseq
    %v61 = vshrl.u32 %v60, 7
    %v62 = vsub.s32 5, %v61
    %v63 = vrot.slane %v38, %v62
    %v64 = vcombine.low %v43, %v47
    %v65 = vcombine.low %v51, %v55
    %v67 = vunpack.c.l.s4 1983009808
    %v68 = vunpack.c.0.s8 %v67
    %v69 = vlaneseq
    %v70 = vshrl.u32 %v69, 7
    %v71 = vsub.s32 %v68, %v70
    %v72 = vrot.slane %v64, %v71
    %v74 = vunpack.c.l.s4 1983009808
    %v75 = vunpack.c.0.s8 %v74
    %v76 = vlaneseq
    %v77 = vshrl.u32 %v76, 7
    %v78 = vsub.s32 %v75, %v77
    %v79 = vrot.slane %v65, %v78
    %v80 = vcombine.low %v72, %v79
    %v81 = vcombine.low %v59, %v63
    %v83 = vunpack.c.l.s4 1983009808
    %v84 = vunpack.c.0.s8 %v83
    %v85 = vlaneseq
    %v86 = vshrl.u32 %v85, 7
    %v87 = vsub.s32 %v84, %v86
    %v88 = vrot.slane %v81, %v87
    %v91 = vadd.f32 %v36, %v80
    %v92 = vadd.f32 %v37, %v88
    %93 = vst [vmem:[#allocation7] sm:$0xff] %v91
    %94 = vst [vmem:[#allocation7 + $0x8] sm:$0xf] %v92
    // Predicated region
    $region18: #{tpu_custom_call.1} parent=1 // pred_check
      _
    $region19: #{tpu_custom_call.1} parent=1 // pred_check_branch
      %96 = sbr.rel (0) target = $region21
    $region20: #{tpu_custom_call.1} parent=1 // pred_region
      %s98 = ssub.s32 192, 192
      %99 = vsyncadd [#allocation4], %s98
      %s101 = sshll.u32 [#allocation7], 4
      %s102 = int_to_ptr.vmem [resolvable:$true] %s101
      %104 = dma.vmem_to_hbm [thread:$0]  %s102, 192, %s2, [#allocation4]
    $region21: #{tpu_custom_call.1} parent=1 // pred_fallthru
      _
    // Predicated region
    $region22: #{tpu_custom_call.1} parent=1 // pred_check
      _
    $region23: #{tpu_custom_call.1} parent=1 // pred_check_branch
      %106 = sbr.rel (0) target = $region25
    $region24: #{tpu_custom_call.1} parent=1 // pred_region
      %107 = dma.done [#allocation4], 192
    $region25: #{tpu_custom_call.1} parent=1 // pred_fallthru
      _
    %108 = vsyncpa [#allocation3], 1
    %109 = vsyncpa [#allocation6], 1
    %110 = vsyncpa [#allocation4], 1

</llo_original>
